<compile_context>
chip_gen: v7x
topology: tpu7x:2x2x1
jax: 0.10.0
libtpu: 0.0.40
codegen_flags: <defaults>
</compile_context>

<pallas_src>
import functools

import jax
import jax.numpy as jnp
from jax.experimental import pallas as pl
from jax.experimental.pallas import tpu as pltpu

DROP_P = 0.5
KEEP_SCALE = 1.0 / (1.0 - DROP_P)  # = 2.0

_LANE = 128     # vreg lane width
_SUBLANE = 8    # vreg sublane count

# murmur3/splitmix-style mixing constants
_GOLDEN = 0x9E3779B9
_MIX1 = 0x85EBCA6B
_MIX2 = 0xC2B2AE35


def _dropout_keep_mask(seed_ref, shape):
    """P(keep)=0.5 mask from a counter-based hash (pure uint32 VPU ops).

    Every element gets a globally unique counter (tile-offset row, column),
    which is mixed with the seed and pushed through a murmur3-style finalizer;
    the top bit of the well-mixed word decides keep/drop.  Works on TPU and in
    interpret mode -- no pltpu.prng_* primitives required.
    """
    tb, f = shape
    row = jax.lax.broadcasted_iota(jnp.int32, shape, 0).astype(jnp.uint32)
    col = jax.lax.broadcasted_iota(jnp.int32, shape, 1).astype(jnp.uint32)
    tile_base = pl.program_id(0).astype(jnp.uint32) * jnp.uint32(tb)
    idx = (tile_base + row) * jnp.uint32(f) + col            # unique per element
    z = idx + seed_ref[0].astype(jnp.uint32) * jnp.uint32(_GOLDEN)
    z = (z ^ (z >> 16)) * jnp.uint32(_MIX1)
    z = (z ^ (z >> 13)) * jnp.uint32(_MIX2)
    z = z ^ (z >> 16)
    return (z & jnp.uint32(0x80000000)) == jnp.uint32(0)     # high bit => p=0.5


def _classifier_kernel(seed_ref, x_ref, wT_ref, o_ref, *, training):
    """One batch tile of y = dropout(x) @ W^T.

    seed_ref : SMEM (1,) int32   (scalar prefetch)
    x_ref    : VMEM (TB, F)      bf16 preferred (f32 accepted, cast in-kernel)
    wT_ref   : VMEM (F, CP)      bf16, lane-padded classes (CP = mult of 128)
    o_ref    : VMEM (TB, CP)     bf16 (f32 MXU accumulation, cast on store)
    """
    x = x_ref[...]
    # bf16-first: keep the dropout select on half-width vregs (v6e/v7x bf16
    # VPU).  If the caller streams f32 we cast once here (no extra HBM pass).
    if x.dtype != jnp.bfloat16:
        x = x.astype(jnp.bfloat16)

    if training:
        keep = _dropout_keep_mask(seed_ref, x.shape)
        x = jnp.where(keep, x * jnp.asarray(KEEP_SCALE, x.dtype),
                      jnp.zeros_like(x))
    # else: eval mode -> dropout is identity.

    o_ref[...] = jnp.dot(
        x, wT_ref[...], preferred_element_type=jnp.float32
    ).astype(o_ref.dtype)


def prepare_weight(weight):
    """One-time weight prep (outside the hot path).

    (C, F) f32  ->  (F, CP) bf16: transposed, cast, zero-padded on the class
    (lane) dim to CP = ceil(C/128)*128 so the kernel output is lane-dense.
    """
    C, F = weight.shape
    CP = ((C + _LANE - 1) // _LANE) * _LANE
    wT = jnp.zeros((F, CP), dtype=jnp.bfloat16)
    wT = wT.at[:, :C].set(weight.T.astype(jnp.bfloat16))
    return wT


def _x_tile_budget_bytes():
    """VMEM budget for the double-buffered x tile (the dominant consumer)."""
    try:
        info = pltpu.get_tpu_info()
        vmem = int(getattr(info, "vmem_capacity_bytes", 0) or 0)
        if vmem >= 96 * 1024 * 1024:       # v5e / v6e: 128 MiB physical VMEM
            return 48 * 1024 * 1024
    except Exception:
        pass
    return 16 * 1024 * 1024                # v7x (64 MiB) / unknown / interpret


def classifier_forward(x, wT_padded, *, seed=0, training=True, block_b=1024):
    """y = dropout(x, 0.5) @ W^T, returned as a lane-padded (B, CP) bf16 slab.

    x         : (B, F) activations; pass bf16 for minimum HBM traffic.
    wT_padded : prepare_weight(weight) -> (F, CP) bf16.
    Returns   : (B, CP) bf16.  Columns >= n_classes are exactly zero; slice
                them off lazily at the consumer (e.g. fused into the loss) to
                avoid an extra full-array HBM pass here.
    """
    B, F = x.shape
    CP = wT_padded.shape[1]
    x_bytes = jnp.dtype(x.dtype).itemsize
    out_bytes = 2  # bf16

    # ---- batch tile -------------------------------------------------------
    budget = _x_tile_budget_bytes()
    tb_cap = max(_SUBLANE, (budget // (2 * F * x_bytes)) // _SUBLANE * _SUBLANE)
    TB = max(_SUBLANE, (min(block_b, tb_cap) // _SUBLANE) * _SUBLANE)
    # v7x megacore: make sure the "parallel" axis has >= 2 steps when the
    # whole batch would otherwise fit in a single tile.
    if pl.cdiv(B, TB) < 2 and B > _SUBLANE:
        TB = ((pl.cdiv(B, 2) + _SUBLANE - 1) // _SUBLANE) * _SUBLANE
    grid = (pl.cdiv(B, TB),)   # ragged last block handled by Pallas (no jnp.pad)

    seed_arr = jnp.array([seed], dtype=jnp.int32)
    kernel = functools.partial(_classifier_kernel, training=training)
    cost = pl.CostEstimate(
        flops=2 * B * F * CP,
        transcendentals=0,
        bytes_accessed=B * F * x_bytes + F * CP * 2 + B * CP * out_bytes,
    )

    def _call(single_weight_buffer):
        if single_weight_buffer:
            # Constant index_map -> the weight is never refetched; a single
            # buffer reclaims F*CP*2 bytes of VMEM (matters on v7x).
            w_spec = pl.BlockSpec((F, CP), lambda i, s: (0, 0),
                                  pipeline_mode=pl.Buffered(1))
            n_w_bufs = 1
        else:
            w_spec = pl.BlockSpec((F, CP), lambda i, s: (0, 0))
            n_w_bufs = 2
        needed = (2 * TB * F * x_bytes            # x double buffer
                  + n_w_bufs * F * CP * 2         # resident weight
                  + 2 * TB * CP * out_bytes)      # out double buffer
        vmem_limit = int(min(max(needed + (8 << 20), 32 << 20), 110 << 20))
        return pl.pallas_call(
            kernel,
            out_shape=jax.ShapeDtypeStruct((B, CP), jnp.bfloat16),
            grid_spec=pltpu.PrefetchScalarGridSpec(
                num_scalar_prefetch=1,                          # seed -> SMEM
                grid=grid,
                in_specs=[
                    pl.BlockSpec((TB, F), lambda i, s: (i, 0)),  # x: streamed
                    w_spec,                                      # W^T: resident
                ],
                out_specs=pl.BlockSpec((TB, CP), lambda i, s: (i, 0)),
            ),
            compiler_params=pltpu.CompilerParams(
                dimension_semantics=("parallel",),   # shard tiles across TCs
                vmem_limit_bytes=vmem_limit,
            ),
            cost_estimate=cost,
        )(seed_arr, x, wT_padded)

    try:
        return jax.block_until_ready(_call(True))
    except Exception:
        # Fallback if this jax version / backend rejects pipeline_mode=Buffered(1).
        return jax.block_until_ready(_call(False))


if __name__ == "__main__":
    # Small shapes consistent with the module head; B=20 exercises a 2-step
    # grid (TB=16) with a ragged last block.
    B, FEAT, NCLS = 20, 128, 16

    key = jax.random.PRNGKey(0)
    kx, kw = jax.random.split(key)
    # bf16 activations straight from the (notional) featurizer -- no wrapper
    # cast pass; halves the dominant streamed-operand bytes.
    x = jax.random.normal(kx, (B, FEAT), dtype=jnp.float32).astype(jnp.bfloat16)
    # Deterministic init mimicking nn.Linear default (uniform +-1/sqrt(fan_in)).
    bound = 1.0 / (FEAT ** 0.5)
    weight = jax.random.uniform(
        kw, (NCLS, FEAT), dtype=jnp.float32, minval=-bound, maxval=bound
    )

    # One-time weight prep (transpose + lane-pad + bf16), outside the hot path.
    # NOTE: bf16 operands deviate slightly from the f32 PyTorch Linear; the
    # reference below is bf16-matched.
    wT_padded = prepare_weight(weight)

    # Eval-mode pass (dropout = identity): check against a bf16-matched ref.
    y_eval = classifier_forward(x, wT_padded, training=False)
    y_eval = jax.block_until_ready(y_eval)
    assert y_eval.shape == (B, wT_padded.shape[1])
    logits = y_eval[:, :NCLS].astype(jnp.float32)     # test-side slice only
    y_ref = x.astype(jnp.float32) @ wT_padded[:, :NCLS].astype(jnp.float32)
    assert jnp.allclose(logits, y_ref, atol=5e-2, rtol=5e-2), "eval-mode mismatch"
    assert jnp.all(y_eval[:, NCLS:] == 0)             # padded lanes exactly zero

    # Training-mode pass (stochastic dropout via in-kernel counter hash).
    y_train = jax.block_until_ready(
        classifier_forward(x, wT_padded, seed=1234, training=True)
    )
    assert y_train.shape == (B, wT_padded.shape[1])
    assert jnp.all(jnp.isfinite(y_train.astype(jnp.float32)))
    # Different seeds -> different dropout masks -> different logits.
    y_train2 = jax.block_until_ready(
        classifier_forward(x, wT_padded, seed=4321, training=True)
    )
    assert not jnp.array_equal(y_train, y_train2)

    print("KERNEL_OK")
</pallas_src>

<mosaic_0001>
module attributes {stable_mosaic.version = 11 : i64} {
  func.func @_classifier_kernel(%arg0: i32, %arg1: memref<1xi32, #tpu.memory_space<smem>>, %arg2: memref<16x128xbf16, #tpu.memory_space<vmem>>, %arg3: memref<128x128xbf16, #tpu.memory_space<vmem>>, %arg4: memref<16x128xbf16, #tpu.memory_space<vmem>>) attributes {dimension_semantics = [#tpu.dimension_semantics<parallel>], iteration_bounds = array<i64: 2>, scalar_prefetch = 1 : i64, scratch_operands = 0 : i64, tpu.core_type = #tpu.core_type<tc>, window_params = [{transform_indices = @transform_0, window_bounds = array<i64: 16, 128>}, {pipeline_mode = #tpu.pipeline_mode<synchronous>, transform_indices = @transform_1, window_bounds = array<i64: 128, 128>}, {transform_indices = @transform_2, window_bounds = array<i64: 16, 128>}]} {
    %c0 = arith.constant 0 : index
    %c0_0 = arith.constant 0 : index
    %0 = vector.load %arg2[%c0, %c0_0] : memref<16x128xbf16, #tpu.memory_space<vmem>>, vector<16x128xbf16>
    %c0_1 = arith.constant 0 : index
    %c0_2 = arith.constant 0 : index
    %1 = vector.load %arg3[%c0_1, %c0_2] : memref<128x128xbf16, #tpu.memory_space<vmem>>, vector<128x128xbf16>
    %cst = arith.constant dense<0.000000e+00> : vector<16x128xf32>
    %2 = tpu.matmul %0, %1, %cst {dimension_numbers = #tpu.dot_dimension_numbers<[1], [0], [0], [1], [0, 0, 1, 1], [], []>} : vector<16x128xbf16>, vector<128x128xbf16>, vector<16x128xf32> -> vector<16x128xf32>
    %3 = arith.truncf %2 : vector<16x128xf32> to vector<16x128xbf16>
    %c0_3 = arith.constant 0 : index
    %c0_4 = arith.constant 0 : index
    %4 = vector.load %arg4[%c0_3, %c0_4] : memref<16x128xbf16, #tpu.memory_space<vmem>>, vector<16x128xbf16>
    tpu.vector_store %arg4[%c0_3, %c0_4], %3 {strides = array<i32>} : memref<16x128xbf16, #tpu.memory_space<vmem>>, vector<16x128xbf16>,
    return
  }
  func.func @transform_0(%arg0: i32, %arg1: memref<1xi32, #tpu.memory_space<smem>>) -> (i32, i32) {
    %c0_i32 = arith.constant 0 : i32
    %c0_i32_0 = arith.constant 0 : i32
    return %arg0, %c0_i32 : i32, i32
  }
  func.func @transform_1(%arg0: i32, %arg1: memref<1xi32, #tpu.memory_space<smem>>) -> (i32, i32) {
    %c0_i32 = arith.constant 0 : i32
    %c0_i32_0 = arith.constant 0 : i32
    %c0_i32_1 = arith.constant 0 : i32
    return %c0_i32, %c0_i32_0 : i32, i32
  }
  func.func @transform_2(%arg0: i32, %arg1: memref<1xi32, #tpu.memory_space<smem>>) -> (i32, i32) {
    %c0_i32 = arith.constant 0 : i32
    %c0_i32_0 = arith.constant 0 : i32
    return %arg0, %c0_i32 : i32, i32
  }
}

module attributes {stable_mosaic.version = 11 : i64} {
  func.func @_classifier_kernel(%arg0: i32, %arg1: memref<1xi32, #tpu.memory_space<smem>>, %arg2: memref<16x128xbf16, #tpu.memory_space<vmem>>, %arg3: memref<128x128xbf16, #tpu.memory_space<vmem>>, %arg4: memref<16x128xbf16, #tpu.memory_space<vmem>>) attributes {dimension_semantics = [#tpu.dimension_semantics<parallel>], iteration_bounds = array<i64: 2>, scalar_prefetch = 1 : i64, scratch_operands = 0 : i64, tpu.core_type = #tpu.core_type<tc>, window_params = [{transform_indices = @transform_0, window_bounds = array<i64: 16, 128>}, {pipeline_mode = #tpu.pipeline_mode<synchronous>, transform_indices = @transform_1, window_bounds = array<i64: 128, 128>}, {transform_indices = @transform_2, window_bounds = array<i64: 16, 128>}]} {
    %c0 = arith.constant 0 : index
    %c0_0 = arith.constant 0 : index
    %0 = vector.load %arg2[%c0, %c0_0] : memref<16x128xbf16, #tpu.memory_space<vmem>>, vector<16x128xbf16>
    %c0_1 = arith.constant 0 : index
    %c0_2 = arith.constant 0 : index
    %1 = vector.load %arg3[%c0_1, %c0_2] : memref<128x128xbf16, #tpu.memory_space<vmem>>, vector<128x128xbf16>
    %cst = arith.constant dense<0.000000e+00> : vector<16x128xf32>
    %2 = tpu.matmul %0, %1, %cst {dimension_numbers = #tpu.dot_dimension_numbers<[1], [0], [0], [1], [0, 0, 1, 1], [], []>} : vector<16x128xbf16>, vector<128x128xbf16>, vector<16x128xf32> -> vector<16x128xf32>
    %3 = arith.truncf %2 : vector<16x128xf32> to vector<16x128xbf16>
    %c0_3 = arith.constant 0 : index
    %c0_4 = arith.constant 0 : index
    %4 = vector.load %arg4[%c0_3, %c0_4] : memref<16x128xbf16, #tpu.memory_space<vmem>>, vector<16x128xbf16>
    tpu.vector_store %arg4[%c0_3, %c0_4], %3 {strides = array<i32>} : memref<16x128xbf16, #tpu.memory_space<vmem>>, vector<16x128xbf16>,
    return
  }
  func.func @transform_0(%arg0: i32, %arg1: memref<1xi32, #tpu.memory_space<smem>>) -> (i32, i32) {
    %c0_i32 = arith.constant 0 : i32
    %c0_i32_0 = arith.constant 0 : i32
    return %arg0, %c0_i32 : i32, i32
  }
  func.func @transform_1(%arg0: i32, %arg1: memref<1xi32, #tpu.memory_space<smem>>) -> (i32, i32) {
    %c0_i32 = arith.constant 0 : i32
    %c0_i32_0 = arith.constant 0 : i32
    %c0_i32_1 = arith.constant 0 : i32
    return %c0_i32, %c0_i32_0 : i32, i32
  }
  func.func @transform_2(%arg0: i32, %arg1: memref<1xi32, #tpu.memory_space<smem>>) -> (i32, i32) {
    %c0_i32 = arith.constant 0 : i32
    %c0_i32_0 = arith.constant 0 : i32
    return %arg0, %c0_i32 : i32, i32
  }
}

</mosaic_0001>

<llo_original>
// kernel: tpu_custom_call.1
$region0: #{tpu_custom_call.1}
  #allocation0 [shape = 'u32[]', space=smem, size = 0x4, offset = 0x4, fixed_abs, tag = 'smem constant byte address 0x4 - core index']
  #allocation1 [shape = 'u32[144,128]{1,0:T(1,128)}', space=vmem, size = 0x12000, scoped, tag = 'internal scratch']
  #allocation2 [shape = 's32[1]{0}', space=sflag, size = 0x4, scoped, tag = 'scoped memory for tpu_custom_call.1']
  #allocation3 [shape = 's32[1]{0:T(128)S(6)}', space=smem, size = 0x200, scoped, tag = 'prefetched SMEM operand 0']
  %s0 = inlined_call_operand.<no memory space> [shape: s32[1], index: 0, kind: input, shape index: {}]
  %s1 = inlined_call_operand.hbm [shape: bf16[20,128], index: 1, kind: input, shape index: {}]
  %s2 = inlined_call_operand.hbm [shape: bf16[128,128], index: 2, kind: input, shape index: {}]
  %s3 = inlined_call_operand.hbm [shape: bf16[20,128], index: 3, kind: output, shape index: {}]
  %s4 = sld [smem:[#allocation0]]
  $region49: #{tpu_custom_call.1} parent=0
    _
  %s6 = ssub.s32 1, %s4
  %s7 = scalar_select 0, %s6, %s4
  %8 = sst [smem:[#allocation3]] %s0
  $region1: #{tpu_custom_call.1} parent=0
    #allocation4 [shape = 'u8[8192]{0}', space=vmem, size = 0x2000, scoped, tag = 'input window, operand 1']
    #allocation5 [shape = 's32[2]{0}', space=sflag, size = 0x8, scoped, tag = 'scoped memory for tpu_custom_call.1']
    #allocation6 [shape = 's32[2]{0}', space=sflag, size = 0x8, scoped, tag = 'scoped memory for tpu_custom_call.1']
    #allocation7 [shape = 'u8[32768]{0}', space=vmem, size = 0x8000, scoped, tag = 'input window, operand 2, single buffered']
    #allocation8 [shape = 's32[1]{0}', space=sflag, size = 0x4, scoped, tag = 'scoped memory for tpu_custom_call.1']
    #allocation9 [shape = 'u8[8192]{0}', space=vmem, size = 0x2000, scoped, tag = 'output window, operand 0']
    %9 = vsyncpa [#allocation5], 0
    %s10 = scalar_lea.sflag [#allocation5], 1
    %11 = vsyncpa %s10, 0
    %12 = vsyncpa [#allocation8], 0
    %13 = vsyncpa [#allocation6], 0
    %s14 = scalar_lea.sflag [#allocation6], 1
    %15 = vsyncpa %s14, 0
    loop: start=0, step=1, limit=4
    $region2: #{tpu_custom_call.1} parent=1 // loop_pre_header
      _
    $region3: #{tpu_custom_call.1} parent=1 // loop_header
      %s17 = sphi 0, %s21
      %p18 = scmp.ge.s32.totalorder %s17, 4
      %s27 = sphi 0, %s29
      %s30 = sphi 0, %s27
      %s31 = sphi 0, %s30
      %s47 = sphi 0, %s31
      %s51 = sphi 0, %s51
      %s53 = sphi 0, %s51
      %s54 = sphi 0, %s53
      %s68 = sphi 0, %s54
      %s74 = sphi 0, %s76
      %s77 = sphi 0, %s74
      %s78 = sphi 0, %s77
      %s94 = sphi 0, %s78
    $region4: #{tpu_custom_call.1} parent=1 // loop_header_branch
      %20 = sbr.rel (%p18) target = $region8
    $region5: #{tpu_custom_call.1} parent=1 // loop_body
      %s22 = ssub.s32 %s17, 1
      %s23 = ssub.s32 %s17, 2
      %s24 = sadd.s32 %s17, 1
      %s25 = ssub.s32 %s17, %s24
      %p26 = scmp.eq.s32.totalorder %s25, 0
      %s28 = sadd.s32 %s27, 1
      %s29 = scalar_select %p26, %s27, %s28
      %p32 = pneg %p26
      %p33 = scmp.eq.s32.totalorder %s17, 1
      %p34 = por %p32, %p33
      %p35 = scmp.ne.s32.totalorder %s27, %s30
      %p36 = scmp.eq.s32.totalorder %s17, 0
      %p37 = por %p35, %p36
      %p38 = scmp.ne.s32.totalorder %s27, %s30
      %p39 = scmp.eq.s32.totalorder %s22, 1
      %p40 = por %p38, %p39
      %p41 = scmp.ne.s32.totalorder %s30, %s31
      %p42 = scmp.eq.s32.totalorder %s22, 0
      %p43 = por %p41, %p42
      %p44 = scmp.ne.s32.totalorder %s30, %s31
      %p45 = scmp.eq.s32.totalorder %s23, 1
      %p46 = por %p44, %p45
      %p48 = scmp.ne.s32.totalorder %s31, %s47
      %p49 = scmp.eq.s32.totalorder %s23, 0
      %p50 = por %p48, %p49
      %s52 = sadd.s32 %s51, 1
      %p55 = scmp.eq.s32.totalorder %s17, 1
      %p56 = scmp.ne.s32.totalorder %s51, %s53
      %p57 = scmp.eq.s32.totalorder %s17, 0
      %p58 = por %p56, %p57
      %p59 = scmp.ne.s32.totalorder %s51, %s53
      %p60 = scmp.eq.s32.totalorder %s22, 1
      %p61 = por %p59, %p60
      %p62 = scmp.ne.s32.totalorder %s53, %s54
      %p63 = scmp.eq.s32.totalorder %s22, 0
      %p64 = por %p62, %p63
      %p65 = scmp.ne.s32.totalorder %s53, %s54
      %p66 = scmp.eq.s32.totalorder %s23, 1
      %p67 = por %p65, %p66
      %p69 = scmp.ne.s32.totalorder %s54, %s68
      %p70 = scmp.eq.s32.totalorder %s23, 0
      %p71 = por %p69, %p70
      %s72 = ssub.s32 %s17, %s24
      %p73 = scmp.eq.s32.totalorder %s72, 0
      %s75 = sadd.s32 %s74, 1
      %s76 = scalar_select %p73, %s74, %s75
      %p79 = pneg %p73
      %p80 = scmp.eq.s32.totalorder %s17, 1
      %p81 = por %p79, %p80
      %p82 = scmp.ne.s32.totalorder %s74, %s77
      %p83 = scmp.eq.s32.totalorder %s17, 0
      %p84 = por %p82, %p83
      %p85 = scmp.ne.s32.totalorder %s74, %s77
      %p86 = scmp.eq.s32.totalorder %s22, 1
      %p87 = por %p85, %p86
      %p88 = scmp.ne.s32.totalorder %s77, %s78
      %p89 = scmp.eq.s32.totalorder %s22, 0
      %p90 = por %p88, %p89
      %p91 = scmp.ne.s32.totalorder %s77, %s78
      %p92 = scmp.eq.s32.totalorder %s23, 1
      %p93 = por %p91, %p92
      %p95 = scmp.ne.s32.totalorder %s78, %s94
      %p96 = scmp.eq.s32.totalorder %s23, 0
      %p97 = por %p95, %p96
      %p98 = scmp.le.s32.totalorder 1, %s17
      %p99 = scmp.lt.s32.totalorder %s17, 3
      %p100 = pnand %p98, %p99
      %p101 = pneg %p100
      // Predicated region
      $region9: #{tpu_custom_call.1} parent=5 // pred_check
        _
      $region10: #{tpu_custom_call.1} parent=5 // pred_check_branch
        %103 = sbr.rel (%p100) target = $region12
      $region11: #{tpu_custom_call.1} parent=5 // pred_region
        %s104 = ssub.s32 %s17, 1
        // Predicated region
        $region13: #{tpu_custom_call.1} parent=11 // pred_check
          %p105 = pneg %p64
        $region14: #{tpu_custom_call.1} parent=11 // pred_check_branch
          %107 = sbr.rel (%p105) target = $region16
        $region15: #{tpu_custom_call.1} parent=11 // pred_region
          %s109 = ssub.s32 1024, 1024
          %110 = vsyncadd [#allocation8], %s109
          %s111 = sshll.u32 [#allocation7], 4
          %s112 = int_to_ptr.vmem [resolvable:$true] %s111
          %117 = dma.hbm_to_vmem [thread:$0]  %s2, 1024, %s112, [#allocation8], 64, 64, 4
        $region16: #{tpu_custom_call.1} parent=11 // pred_fallthru
          _
      $region12: #{tpu_custom_call.1} parent=5 // pred_fallthru
        _
      %p118 = scmp.lt.s32.totalorder %s17, 2
      // Predicated region
      $region17: #{tpu_custom_call.1} parent=5 // pred_check
        %p119 = pneg %p118
      $region18: #{tpu_custom_call.1} parent=5 // pred_check_branch
        %121 = sbr.rel (%p119) target = $region20
      $region19: #{tpu_custom_call.1} parent=5 // pred_region
        // Predicated region
        $region21: #{tpu_custom_call.1} parent=19 // pred_check
          %p122 = pneg %p37
        $region22: #{tpu_custom_call.1} parent=19 // pred_check_branch
          %124 = sbr.rel (%p122) target = $region24
        $region23: #{tpu_custom_call.1} parent=19 // pred_region
          %s125 = sand.u32 %s27, 1
          %s126 = scalar_lea.sflag [#allocation5], %s125
          %s127 = sand.u32 %s27, 1
          %s128 = smul.addr %s127, 8
          %s129 = scalar_lea.vmem [#allocation4], %s128
          %s130 = smul.u32 2, %s17
          %s131 = ssub.s32 3, %s130
          %p132 = scmp.lt.s32.totalorder %s131, 2
          %s133 = scalar_select %p132, %s131, 2
          %s134 = smul.u32 64, %s133
          %s136 = ssub.s32 128, %s134
          %137 = vsyncadd %s126, %s136
          %p138 = scmp.ne.s32.totalorder 0, %s134
          %s139 = smul.addr %s130, 64
          %s140 = scalar_lea.hbm %s1, %s139
          %s141 = smul.u32 4, %s133
          %s142 = sshll.u32 %s129, 4
          %s143 = int_to_ptr.vmem [resolvable:$true] %s142
          %s144 = sshll.u32 %s141, 4
          %148 = dma.hbm_to_vmem [thread:$0]  (%p138), %s140, %s144, %s143, %s126, 64, 64, 4
        $region24: #{tpu_custom_call.1} parent=19 // pred_fallthru
          _
      $region20: #{tpu_custom_call.1} parent=5 // pred_fallthru
        _
      %p149 = scmp.le.s32.totalorder 1, %s17
      %p150 = scmp.lt.s32.totalorder %s17, 3
      %p151 = pnand %p149, %p150
      %p152 = pneg %p151
      // Predicated region
      $region25: #{tpu_custom_call.1} parent=5 // pred_check
        _
      $region26: #{tpu_custom_call.1} parent=5 // pred_check_branch
        %154 = sbr.rel (%p151) target = $region28
      $region27: #{tpu_custom_call.1} parent=5 // pred_region
        %s155 = ssub.s32 %s17, 1
        %s156 = sand.u32 %s30, 1
        %s157 = scalar_lea.sflag [#allocation5], %s156
        %s158 = sand.u32 %s30, 1
        %s159 = smul.addr %s158, 8
        %s160 = scalar_lea.vmem [#allocation4], %s159
        // Predicated region
        $region29: #{tpu_custom_call.1} parent=27 // pred_check
          %p161 = pneg %p43
        $region30: #{tpu_custom_call.1} parent=27 // pred_check_branch
          %163 = sbr.rel (%p161) target = $region32
        $region31: #{tpu_custom_call.1} parent=27 // pred_region
          %164 = dma.done %s157, 128
        $region32: #{tpu_custom_call.1} parent=27 // pred_fallthru
          _
        // Predicated region
        $region33: #{tpu_custom_call.1} parent=27 // pred_check
          %p165 = pneg %p64
        $region34: #{tpu_custom_call.1} parent=27 // pred_check_branch
          %167 = sbr.rel (%p165) target = $region36
        $region35: #{tpu_custom_call.1} parent=27 // pred_region
          %168 = dma.done [#allocation8], 1024
        $region36: #{tpu_custom_call.1} parent=27 // pred_fallthru
          _
        %s169 = sand.u32 %s30, 1
        %s170 = scalar_lea.sflag [#allocation5], %s169
        %s171 = sand.u32 %s30, 1
        %s172 = smul.addr %s171, 8
        %s173 = scalar_lea.vmem [#allocation4], %s172
        %p174 = pneg %p43
        %p175 = pneg %p40
        %p176 = pneg %p64
        %p177 = pneg %p61
        %p178 = pneg %p90
        %p179 = pneg %p87
        %s180 = sand.u32 %s77, 1
        %s181 = scalar_lea.sflag [#allocation6], %s180
        %s182 = sand.u32 %s77, 1
        %s183 = smul.addr %s182, 8
        %s184 = scalar_lea.vmem [#allocation9], %s183
        %s185 = smul.u32 2, %s22
        %s186 = ssub.s32 3, %s185
        %p187 = scmp.lt.s32.totalorder %s186, 2
        %s188 = scalar_select %p187, %s186, 2
        %s189 = smul.u32 64, %s188
        %s190 = smul.u32 2, %s22
        %s191 = ssub.s32 3, %s190
        %p192 = scmp.lt.s32.totalorder %s191, 2
        %s193 = scalar_select %p192, %s191, 2
        %s194 = smul.u32 64, %s193
        %v196 = vld [vmem:[%s160] sm:$0xf]
        %v197 = vld [vmem:[%s160 + $0x4] sm:$0xf]
        %v198 = vld [vmem:[#allocation7] sm:$0xf]
        %v199 = vld [vmem:[#allocation7 + $0x4] sm:$0xf]
        %v200 = vld [vmem:[#allocation7 + $0x8] sm:$0xf]
        %v201 = vld [vmem:[#allocation7 + $0xc] sm:$0xf]
        %v202 = vld [vmem:[#allocation7 + $0x10] sm:$0xf]
        %v203 = vld [vmem:[#allocation7 + $0x14] sm:$0xf]
        %v204 = vld [vmem:[#allocation7 + $0x18] sm:$0xf]
        %v205 = vld [vmem:[#allocation7 + $0x1c] sm:$0xf]
        %v206 = vld [vmem:[#allocation7 + $0x20] sm:$0xf]
        %v207 = vld [vmem:[#allocation7 + $0x24] sm:$0xf]
        %v208 = vld [vmem:[#allocation7 + $0x28] sm:$0xf]
        %v209 = vld [vmem:[#allocation7 + $0x2c] sm:$0xf]
        %v210 = vld [vmem:[#allocation7 + $0x30] sm:$0xf]
        %v211 = vld [vmem:[#allocation7 + $0x34] sm:$0xf]
        %v212 = vld [vmem:[#allocation7 + $0x38] sm:$0xf]
        %v213 = vld [vmem:[#allocation7 + $0x3c] sm:$0xf]
        %v216 = vunpack.c.l.b16 %v196
        %v217 = vunpack.c.l.b16 %v197
        %v218 = vpack.c.b16 %v217, %v216
        %v236 = vunpack.c.l.b16 %v198
        %v237 = vunpack.c.l.b16 %v199
        %v238 = vunpack.c.l.b16 %v200
        %v239 = vunpack.c.l.b16 %v201
        %v240 = vunpack.c.l.b16 %v202
        %v241 = vunpack.c.l.b16 %v203
        %v242 = vunpack.c.l.b16 %v204
        %v243 = vunpack.c.l.b16 %v205
        %v244 = vunpack.c.l.b16 %v206
        %v245 = vunpack.c.l.b16 %v207
        %v246 = vunpack.c.l.b16 %v208
        %v247 = vunpack.c.l.b16 %v209
        %v248 = vunpack.c.l.b16 %v210
        %v249 = vunpack.c.l.b16 %v211
        %v250 = vunpack.c.l.b16 %v212
        %v251 = vunpack.c.l.b16 %v213
        %v252 = vpack.c.b16 %v237, %v236
        %v253 = vpack.c.b16 %v239, %v238
        %v254 = vpack.c.b16 %v241, %v240
        %v255 = vpack.c.b16 %v243, %v242
        %v256 = vpack.c.b16 %v245, %v244
        %v257 = vpack.c.b16 %v247, %v246
        %v258 = vpack.c.b16 %v249, %v248
        %v259 = vpack.c.b16 %v251, %v250
        %268 = vmatprep.subr.bf16.mxu0 0
        %269 = vmatpush1.bf16.msra.mxu0 %v252
        %270 = vmatprep.subr.bf16.mxu0 0
        %271 = vmatpush1.bf16.msra.mxu0 %v253
        %272 = vmatprep.subr.bf16.mxu0 0
        %273 = vmatpush1.bf16.msra.mxu0 %v254
        %274 = vmatprep.subr.bf16.mxu0 0
        %275 = vmatpush1.bf16.msra.mxu0 %v255
        %276 = vmatprep.subr.bf16.mxu0 0
        %277 = vmatpush1.bf16.msra.mxu0 %v256
        %278 = vmatprep.subr.bf16.mxu0 0
        %279 = vmatpush1.bf16.msra.mxu0 %v257
        %280 = vmatprep.subr.bf16.mxu0 0
        %281 = vmatpush1.bf16.msra.mxu0 %v258
        %282 = vmatprep.subr.bf16.mxu0 0
        %283 = vmatpush1.bf16.msra.mxu0 %v259
        %284 = vmatprep.subr.bf16.mxu0 0
        %285 = vmatpush1.bf16.msra.mxu0 0
        %286 = vmatprep.subr.bf16.mxu0 0
        %287 = vmatpush1.bf16.msra.mxu0 0
        %288 = vmatprep.subr.bf16.mxu0 0
        %289 = vmatpush1.bf16.msra.mxu0 0
        %290 = vmatprep.subr.bf16.mxu0 0
        %291 = vmatpush1.bf16.msra.mxu0 0
        %292 = vmatprep.subr.bf16.mxu0 0
        %293 = vmatpush1.bf16.msra.mxu0 0
        %294 = vmatprep.subr.bf16.mxu0 0
        %295 = vmatpush1.bf16.msra.mxu0 0
        %296 = vmatprep.subr.bf16.mxu0 0
        %297 = vmatpush1.bf16.msra.mxu0 0
        %298 = vmatprep.subr.bf16.mxu0 0
        %299 = vmatpush1.bf16.msra.mxu0 0
        %300 = vmatprep.mubr.bf16.mxu0 0
        %301 = vmatmul.mubr.bf16.gmra.mrb[0].mxu0 %v218
        %v302 = vpop.f32.mrb[0].mxu0
        %v303 = vadd.f32 0.0, %v302
        %v304 = vpop.f32.mrb[0].mxu0
        %v305 = vpop.f32.mrb[0].mxu0
        %v306 = vadd.f32 0.0, %v305
        %v307 = vpop.f32.mrb[0].mxu0
        %308 = vdwg.mxu0
        %v309 = vpack.c.bf16 %v306, %v303
        %v311 = vunpack.c.l.b16 %v309
        %v312 = vunpack.c.h.b16 %v309
        %v313 = vpack.c.b16 %v311, %v311
        %v314 = vpack.c.b16 %v312, %v312
        %317 = vst [vmem:[%s184] sm:$0xf] %v313
        %318 = vst [vmem:[%s184 + $0x4] sm:$0xf] %v314
        %s319 = sand.u32 %s77, 1
        %s320 = scalar_lea.sflag [#allocation6], %s319
        %s321 = sand.u32 %s77, 1
        %s322 = smul.addr %s321, 8
        %s323 = scalar_lea.vmem [#allocation9], %s322
        // Predicated region
        $region37: #{tpu_custom_call.1} parent=27 // pred_check
          %p324 = pneg %p87
        $region38: #{tpu_custom_call.1} parent=27 // pred_check_branch
          %326 = sbr.rel (%p324) target = $region40
        $region39: #{tpu_custom_call.1} parent=27 // pred_region
          %s327 = smul.u32 2, %s22
          %s328 = ssub.s32 3, %s327
          %p329 = scmp.lt.s32.totalorder %s328, 2
          %s330 = scalar_select %p329, %s328, 2
          %s331 = smul.u32 64, %s330
          %s333 = ssub.s32 128, %s331
          %334 = vsyncadd %s320, %s333
          %p335 = scmp.ne.s32.totalorder 0, %s331
          %s336 = smul.addr %s327, 64
          %s337 = scalar_lea.hbm %s3, %s336
          %s338 = smul.u32 4, %s330
          %s339 = sshll.u32 %s323, 4
          %s340 = int_to_ptr.vmem [resolvable:$true] %s339
          %s341 = sshll.u32 %s338, 4
          %345 = dma.vmem_to_hbm [thread:$0]  (%p335), %s340, %s341, %s337, %s320, 64, 64, 4
        $region40: #{tpu_custom_call.1} parent=27 // pred_fallthru
          _
      $region28: #{tpu_custom_call.1} parent=5 // pred_fallthru
        _
      %p346 = scmp.le.s32.totalorder 2, %s17
      // Predicated region
      $region41: #{tpu_custom_call.1} parent=5 // pred_check
        %p347 = pneg %p346
      $region42: #{tpu_custom_call.1} parent=5 // pred_check_branch
        %349 = sbr.rel (%p347) target = $region44
      $region43: #{tpu_custom_call.1} parent=5 // pred_region
        %s350 = ssub.s32 %s17, 2
        // Predicated region
        $region45: #{tpu_custom_call.1} parent=43 // pred_check
          %p351 = pneg %p93
        $region46: #{tpu_custom_call.1} parent=43 // pred_check_branch
          %353 = sbr.rel (%p351) target = $region48
        $region47: #{tpu_custom_call.1} parent=43 // pred_region
          %s354 = sand.u32 %s78, 1
          %s355 = scalar_lea.sflag [#allocation6], %s354
          %s356 = sand.u32 %s78, 1
          %s357 = smul.addr %s356, 8
          %s358 = scalar_lea.vmem [#allocation9], %s357
          %359 = dma.done %s355, 128
        $region48: #{tpu_custom_call.1} parent=43 // pred_fallthru
          _
      $region44: #{tpu_custom_call.1} parent=5 // pred_fallthru
        _
    $region6: #{tpu_custom_call.1} parent=1 // loop_footer
      %s21 = sadd.s32 1, %s17
    $region7: #{tpu_custom_call.1} parent=1 // loop_footer_branch
      %16 = sbr.rel target = $region3
    $region8: #{tpu_custom_call.1} parent=1 // loop_exit
      _
    %360 = vsyncpa [#allocation5], 1
    %s361 = scalar_lea.sflag [#allocation5], 1
    %362 = vsyncpa %s361, 1
    %363 = vsyncpa [#allocation8], 1
    %364 = vsyncpa [#allocation6], 1
    %s365 = scalar_lea.sflag [#allocation6], 1
    %366 = vsyncpa %s365, 1

// kernel: tpu_custom_call.1
$region0: #{tpu_custom_call.1}
  #allocation0 [shape = 'u32[]', space=smem, size = 0x4, offset = 0x4, fixed_abs, tag = 'smem constant byte address 0x4 - core index']
  #allocation1 [shape = 'u32[144,128]{1,0:T(1,128)}', space=vmem, size = 0x12000, scoped, tag = 'internal scratch']
  #allocation2 [shape = 's32[1]{0}', space=sflag, size = 0x4, scoped, tag = 'scoped memory for tpu_custom_call.1']
  #allocation3 [shape = 's32[1]{0:T(128)S(6)}', space=smem, size = 0x200, scoped, tag = 'prefetched SMEM operand 0']
  %s0 = inlined_call_operand.<no memory space> [shape: s32[1], index: 0, kind: input, shape index: {}]
  %s1 = inlined_call_operand.hbm [shape: bf16[20,128], index: 1, kind: input, shape index: {}]
  %s2 = inlined_call_operand.hbm [shape: bf16[128,128], index: 2, kind: input, shape index: {}]
  %s3 = inlined_call_operand.hbm [shape: bf16[20,128], index: 3, kind: output, shape index: {}]
  %s4 = sld [smem:[#allocation0]]
  $region49: #{tpu_custom_call.1} parent=0
    _
  %s6 = ssub.s32 1, %s4
  %s7 = scalar_select 0, %s6, %s4
  %8 = sst [smem:[#allocation3]] %s0
  $region1: #{tpu_custom_call.1} parent=0
    #allocation4 [shape = 'u8[8192]{0}', space=vmem, size = 0x2000, scoped, tag = 'input window, operand 1']
    #allocation5 [shape = 's32[2]{0}', space=sflag, size = 0x8, scoped, tag = 'scoped memory for tpu_custom_call.1']
    #allocation6 [shape = 's32[2]{0}', space=sflag, size = 0x8, scoped, tag = 'scoped memory for tpu_custom_call.1']
    #allocation7 [shape = 'u8[32768]{0}', space=vmem, size = 0x8000, scoped, tag = 'input window, operand 2, single buffered']
    #allocation8 [shape = 's32[1]{0}', space=sflag, size = 0x4, scoped, tag = 'scoped memory for tpu_custom_call.1']
    #allocation9 [shape = 'u8[8192]{0}', space=vmem, size = 0x2000, scoped, tag = 'output window, operand 0']
    %9 = vsyncpa [#allocation5], 0
    %s10 = scalar_lea.sflag [#allocation5], 1
    %11 = vsyncpa %s10, 0
    %12 = vsyncpa [#allocation8], 0
    %13 = vsyncpa [#allocation6], 0
    %s14 = scalar_lea.sflag [#allocation6], 1
    %15 = vsyncpa %s14, 0
    loop: start=0, step=1, limit=4
    $region2: #{tpu_custom_call.1} parent=1 // loop_pre_header
      _
    $region3: #{tpu_custom_call.1} parent=1 // loop_header
      %s17 = sphi 0, %s21
      %p18 = scmp.ge.s32.totalorder %s17, 4
      %s27 = sphi 0, %s29
      %s30 = sphi 0, %s27
      %s31 = sphi 0, %s30
      %s47 = sphi 0, %s31
      %s51 = sphi 0, %s51
      %s53 = sphi 0, %s51
      %s54 = sphi 0, %s53
      %s68 = sphi 0, %s54
      %s74 = sphi 0, %s76
      %s77 = sphi 0, %s74
      %s78 = sphi 0, %s77
      %s94 = sphi 0, %s78
    $region4: #{tpu_custom_call.1} parent=1 // loop_header_branch
      %20 = sbr.rel (%p18) target = $region8
    $region5: #{tpu_custom_call.1} parent=1 // loop_body
      %s22 = ssub.s32 %s17, 1
      %s23 = ssub.s32 %s17, 2
      %s24 = sadd.s32 %s17, 1
      %s25 = ssub.s32 %s17, %s24
      %p26 = scmp.eq.s32.totalorder %s25, 0
      %s28 = sadd.s32 %s27, 1
      %s29 = scalar_select %p26, %s27, %s28
      %p32 = pneg %p26
      %p33 = scmp.eq.s32.totalorder %s17, 1
      %p34 = por %p32, %p33
      %p35 = scmp.ne.s32.totalorder %s27, %s30
      %p36 = scmp.eq.s32.totalorder %s17, 0
      %p37 = por %p35, %p36
      %p38 = scmp.ne.s32.totalorder %s27, %s30
      %p39 = scmp.eq.s32.totalorder %s22, 1
      %p40 = por %p38, %p39
      %p41 = scmp.ne.s32.totalorder %s30, %s31
      %p42 = scmp.eq.s32.totalorder %s22, 0
      %p43 = por %p41, %p42
      %p44 = scmp.ne.s32.totalorder %s30, %s31
      %p45 = scmp.eq.s32.totalorder %s23, 1
      %p46 = por %p44, %p45
      %p48 = scmp.ne.s32.totalorder %s31, %s47
      %p49 = scmp.eq.s32.totalorder %s23, 0
      %p50 = por %p48, %p49
      %s52 = sadd.s32 %s51, 1
      %p55 = scmp.eq.s32.totalorder %s17, 1
      %p56 = scmp.ne.s32.totalorder %s51, %s53
      %p57 = scmp.eq.s32.totalorder %s17, 0
      %p58 = por %p56, %p57
      %p59 = scmp.ne.s32.totalorder %s51, %s53
      %p60 = scmp.eq.s32.totalorder %s22, 1
      %p61 = por %p59, %p60
      %p62 = scmp.ne.s32.totalorder %s53, %s54
      %p63 = scmp.eq.s32.totalorder %s22, 0
      %p64 = por %p62, %p63
      %p65 = scmp.ne.s32.totalorder %s53, %s54
      %p66 = scmp.eq.s32.totalorder %s23, 1
      %p67 = por %p65, %p66
      %p69 = scmp.ne.s32.totalorder %s54, %s68
      %p70 = scmp.eq.s32.totalorder %s23, 0
      %p71 = por %p69, %p70
      %s72 = ssub.s32 %s17, %s24
      %p73 = scmp.eq.s32.totalorder %s72, 0
      %s75 = sadd.s32 %s74, 1
      %s76 = scalar_select %p73, %s74, %s75
      %p79 = pneg %p73
      %p80 = scmp.eq.s32.totalorder %s17, 1
      %p81 = por %p79, %p80
      %p82 = scmp.ne.s32.totalorder %s74, %s77
      %p83 = scmp.eq.s32.totalorder %s17, 0
      %p84 = por %p82, %p83
      %p85 = scmp.ne.s32.totalorder %s74, %s77
      %p86 = scmp.eq.s32.totalorder %s22, 1
      %p87 = por %p85, %p86
      %p88 = scmp.ne.s32.totalorder %s77, %s78
      %p89 = scmp.eq.s32.totalorder %s22, 0
      %p90 = por %p88, %p89
      %p91 = scmp.ne.s32.totalorder %s77, %s78
      %p92 = scmp.eq.s32.totalorder %s23, 1
      %p93 = por %p91, %p92
      %p95 = scmp.ne.s32.totalorder %s78, %s94
      %p96 = scmp.eq.s32.totalorder %s23, 0
      %p97 = por %p95, %p96
      %p98 = scmp.le.s32.totalorder 1, %s17
      %p99 = scmp.lt.s32.totalorder %s17, 3
      %p100 = pnand %p98, %p99
      %p101 = pneg %p100
      // Predicated region
      $region9: #{tpu_custom_call.1} parent=5 // pred_check
        _
      $region10: #{tpu_custom_call.1} parent=5 // pred_check_branch
        %103 = sbr.rel (%p100) target = $region12
      $region11: #{tpu_custom_call.1} parent=5 // pred_region
        %s104 = ssub.s32 %s17, 1
        // Predicated region
        $region13: #{tpu_custom_call.1} parent=11 // pred_check
          %p105 = pneg %p64
        $region14: #{tpu_custom_call.1} parent=11 // pred_check_branch
          %107 = sbr.rel (%p105) target = $region16
        $region15: #{tpu_custom_call.1} parent=11 // pred_region
          %s109 = ssub.s32 1024, 1024
          %110 = vsyncadd [#allocation8], %s109
          %s111 = sshll.u32 [#allocation7], 4
          %s112 = int_to_ptr.vmem [resolvable:$true] %s111
          %117 = dma.hbm_to_vmem [thread:$0]  %s2, 1024, %s112, [#allocation8], 64, 64, 4
        $region16: #{tpu_custom_call.1} parent=11 // pred_fallthru
          _
      $region12: #{tpu_custom_call.1} parent=5 // pred_fallthru
        _
      %p118 = scmp.lt.s32.totalorder %s17, 2
      // Predicated region
      $region17: #{tpu_custom_call.1} parent=5 // pred_check
        %p119 = pneg %p118
      $region18: #{tpu_custom_call.1} parent=5 // pred_check_branch
        %121 = sbr.rel (%p119) target = $region20
      $region19: #{tpu_custom_call.1} parent=5 // pred_region
        // Predicated region
        $region21: #{tpu_custom_call.1} parent=19 // pred_check
          %p122 = pneg %p37
        $region22: #{tpu_custom_call.1} parent=19 // pred_check_branch
          %124 = sbr.rel (%p122) target = $region24
        $region23: #{tpu_custom_call.1} parent=19 // pred_region
          %s125 = sand.u32 %s27, 1
          %s126 = scalar_lea.sflag [#allocation5], %s125
          %s127 = sand.u32 %s27, 1
          %s128 = smul.addr %s127, 8
          %s129 = scalar_lea.vmem [#allocation4], %s128
          %s130 = smul.u32 2, %s17
          %s131 = ssub.s32 3, %s130
          %p132 = scmp.lt.s32.totalorder %s131, 2
          %s133 = scalar_select %p132, %s131, 2
          %s134 = smul.u32 64, %s133
          %s136 = ssub.s32 128, %s134
          %137 = vsyncadd %s126, %s136
          %p138 = scmp.ne.s32.totalorder 0, %s134
          %s139 = smul.addr %s130, 64
          %s140 = scalar_lea.hbm %s1, %s139
          %s141 = smul.u32 4, %s133
          %s142 = sshll.u32 %s129, 4
          %s143 = int_to_ptr.vmem [resolvable:$true] %s142
          %s144 = sshll.u32 %s141, 4
          %148 = dma.hbm_to_vmem [thread:$0]  (%p138), %s140, %s144, %s143, %s126, 64, 64, 4
        $region24: #{tpu_custom_call.1} parent=19 // pred_fallthru
          _
      $region20: #{tpu_custom_call.1} parent=5 // pred_fallthru
        _
      %p149 = scmp.le.s32.totalorder 1, %s17
      %p150 = scmp.lt.s32.totalorder %s17, 3
      %p151 = pnand %p149, %p150
      %p152 = pneg %p151
      // Predicated region
      $region25: #{tpu_custom_call.1} parent=5 // pred_check
        _
      $region26: #{tpu_custom_call.1} parent=5 // pred_check_branch
        %154 = sbr.rel (%p151) target = $region28
      $region27: #{tpu_custom_call.1} parent=5 // pred_region
        %s155 = ssub.s32 %s17, 1
        %s156 = sand.u32 %s30, 1
        %s157 = scalar_lea.sflag [#allocation5], %s156
        %s158 = sand.u32 %s30, 1
        %s159 = smul.addr %s158, 8
        %s160 = scalar_lea.vmem [#allocation4], %s159
        // Predicated region
        $region29: #{tpu_custom_call.1} parent=27 // pred_check
          %p161 = pneg %p43
        $region30: #{tpu_custom_call.1} parent=27 // pred_check_branch
          %163 = sbr.rel (%p161) target = $region32
        $region31: #{tpu_custom_call.1} parent=27 // pred_region
          %164 = dma.done %s157, 128
        $region32: #{tpu_custom_call.1} parent=27 // pred_fallthru
          _
        // Predicated region
        $region33: #{tpu_custom_call.1} parent=27 // pred_check
          %p165 = pneg %p64
        $region34: #{tpu_custom_call.1} parent=27 // pred_check_branch
          %167 = sbr.rel (%p165) target = $region36
        $region35: #{tpu_custom_call.1} parent=27 // pred_region
          %168 = dma.done [#allocation8], 1024
        $region36: #{tpu_custom_call.1} parent=27 // pred_fallthru
          _
        %s169 = sand.u32 %s30, 1
        %s170 = scalar_lea.sflag [#allocation5], %s169
        %s171 = sand.u32 %s30, 1
        %s172 = smul.addr %s171, 8
        %s173 = scalar_lea.vmem [#allocation4], %s172
        %p174 = pneg %p43
        %p175 = pneg %p40
        %p176 = pneg %p64
        %p177 = pneg %p61
        %p178 = pneg %p90
        %p179 = pneg %p87
        %s180 = sand.u32 %s77, 1
        %s181 = scalar_lea.sflag [#allocation6], %s180
        %s182 = sand.u32 %s77, 1
        %s183 = smul.addr %s182, 8
        %s184 = scalar_lea.vmem [#allocation9], %s183
        %s185 = smul.u32 2, %s22
        %s186 = ssub.s32 3, %s185
        %p187 = scmp.lt.s32.totalorder %s186, 2
        %s188 = scalar_select %p187, %s186, 2
        %s189 = smul.u32 64, %s188
        %s190 = smul.u32 2, %s22
        %s191 = ssub.s32 3, %s190
        %p192 = scmp.lt.s32.totalorder %s191, 2
        %s193 = scalar_select %p192, %s191, 2
        %s194 = smul.u32 64, %s193
        %v196 = vld [vmem:[%s160] sm:$0xf]
        %v197 = vld [vmem:[%s160 + $0x4] sm:$0xf]
        %v198 = vld [vmem:[#allocation7] sm:$0xf]
        %v199 = vld [vmem:[#allocation7 + $0x4] sm:$0xf]
        %v200 = vld [vmem:[#allocation7 + $0x8] sm:$0xf]
        %v201 = vld [vmem:[#allocation7 + $0xc] sm:$0xf]
        %v202 = vld [vmem:[#allocation7 + $0x10] sm:$0xf]
        %v203 = vld [vmem:[#allocation7 + $0x14] sm:$0xf]
        %v204 = vld [vmem:[#allocation7 + $0x18] sm:$0xf]
        %v205 = vld [vmem:[#allocation7 + $0x1c] sm:$0xf]
        %v206 = vld [vmem:[#allocation7 + $0x20] sm:$0xf]
        %v207 = vld [vmem:[#allocation7 + $0x24] sm:$0xf]
        %v208 = vld [vmem:[#allocation7 + $0x28] sm:$0xf]
        %v209 = vld [vmem:[#allocation7 + $0x2c] sm:$0xf]
        %v210 = vld [vmem:[#allocation7 + $0x30] sm:$0xf]
        %v211 = vld [vmem:[#allocation7 + $0x34] sm:$0xf]
        %v212 = vld [vmem:[#allocation7 + $0x38] sm:$0xf]
        %v213 = vld [vmem:[#allocation7 + $0x3c] sm:$0xf]
        %v216 = vunpack.c.l.b16 %v196
        %v217 = vunpack.c.l.b16 %v197
        %v218 = vpack.c.b16 %v217, %v216
        %v236 = vunpack.c.l.b16 %v198
        %v237 = vunpack.c.l.b16 %v199
        %v238 = vunpack.c.l.b16 %v200
        %v239 = vunpack.c.l.b16 %v201
        %v240 = vunpack.c.l.b16 %v202
        %v241 = vunpack.c.l.b16 %v203
        %v242 = vunpack.c.l.b16 %v204
        %v243 = vunpack.c.l.b16 %v205
        %v244 = vunpack.c.l.b16 %v206
        %v245 = vunpack.c.l.b16 %v207
        %v246 = vunpack.c.l.b16 %v208
        %v247 = vunpack.c.l.b16 %v209
        %v248 = vunpack.c.l.b16 %v210
        %v249 = vunpack.c.l.b16 %v211
        %v250 = vunpack.c.l.b16 %v212
        %v251 = vunpack.c.l.b16 %v213
        %v252 = vpack.c.b16 %v237, %v236
        %v253 = vpack.c.b16 %v239, %v238
        %v254 = vpack.c.b16 %v241, %v240
        %v255 = vpack.c.b16 %v243, %v242
        %v256 = vpack.c.b16 %v245, %v244
        %v257 = vpack.c.b16 %v247, %v246
        %v258 = vpack.c.b16 %v249, %v248
        %v259 = vpack.c.b16 %v251, %v250
        %268 = vmatprep.subr.bf16.mxu0 0
        %269 = vmatpush1.bf16.msra.mxu0 %v252
        %270 = vmatprep.subr.bf16.mxu0 0
        %271 = vmatpush1.bf16.msra.mxu0 %v253
        %272 = vmatprep.subr.bf16.mxu0 0
        %273 = vmatpush1.bf16.msra.mxu0 %v254
        %274 = vmatprep.subr.bf16.mxu0 0
        %275 = vmatpush1.bf16.msra.mxu0 %v255
        %276 = vmatprep.subr.bf16.mxu0 0
        %277 = vmatpush1.bf16.msra.mxu0 %v256
        %278 = vmatprep.subr.bf16.mxu0 0
        %279 = vmatpush1.bf16.msra.mxu0 %v257
        %280 = vmatprep.subr.bf16.mxu0 0
        %281 = vmatpush1.bf16.msra.mxu0 %v258
        %282 = vmatprep.subr.bf16.mxu0 0
        %283 = vmatpush1.bf16.msra.mxu0 %v259
        %284 = vmatprep.subr.bf16.mxu0 0
        %285 = vmatpush1.bf16.msra.mxu0 0
        %286 = vmatprep.subr.bf16.mxu0 0
        %287 = vmatpush1.bf16.msra.mxu0 0
        %288 = vmatprep.subr.bf16.mxu0 0
        %289 = vmatpush1.bf16.msra.mxu0 0
        %290 = vmatprep.subr.bf16.mxu0 0
        %291 = vmatpush1.bf16.msra.mxu0 0
        %292 = vmatprep.subr.bf16.mxu0 0
        %293 = vmatpush1.bf16.msra.mxu0 0
        %294 = vmatprep.subr.bf16.mxu0 0
        %295 = vmatpush1.bf16.msra.mxu0 0
        %296 = vmatprep.subr.bf16.mxu0 0
        %297 = vmatpush1.bf16.msra.mxu0 0
        %298 = vmatprep.subr.bf16.mxu0 0
        %299 = vmatpush1.bf16.msra.mxu0 0
        %300 = vmatprep.mubr.bf16.mxu0 0
        %301 = vmatmul.mubr.bf16.gmra.mrb[0].mxu0 %v218
        %v302 = vpop.f32.mrb[0].mxu0
        %v303 = vadd.f32 0.0, %v302
        %v304 = vpop.f32.mrb[0].mxu0
        %v305 = vpop.f32.mrb[0].mxu0
        %v306 = vadd.f32 0.0, %v305
        %v307 = vpop.f32.mrb[0].mxu0
        %308 = vdwg.mxu0
        %v309 = vpack.c.bf16 %v306, %v303
        %v311 = vunpack.c.l.b16 %v309
        %v312 = vunpack.c.h.b16 %v309
        %v313 = vpack.c.b16 %v311, %v311
        %v314 = vpack.c.b16 %v312, %v312
        %317 = vst [vmem:[%s184] sm:$0xf] %v313
        %318 = vst [vmem:[%s184 + $0x4] sm:$0xf] %v314
        %s319 = sand.u32 %s77, 1
        %s320 = scalar_lea.sflag [#allocation6], %s319
        %s321 = sand.u32 %s77, 1
        %s322 = smul.addr %s321, 8
        %s323 = scalar_lea.vmem [#allocation9], %s322
        // Predicated region
        $region37: #{tpu_custom_call.1} parent=27 // pred_check
          %p324 = pneg %p87
        $region38: #{tpu_custom_call.1} parent=27 // pred_check_branch
          %326 = sbr.rel (%p324) target = $region40
        $region39: #{tpu_custom_call.1} parent=27 // pred_region
          %s327 = smul.u32 2, %s22
          %s328 = ssub.s32 3, %s327
          %p329 = scmp.lt.s32.totalorder %s328, 2
          %s330 = scalar_select %p329, %s328, 2
          %s331 = smul.u32 64, %s330
          %s333 = ssub.s32 128, %s331
          %334 = vsyncadd %s320, %s333
          %p335 = scmp.ne.s32.totalorder 0, %s331
          %s336 = smul.addr %s327, 64
          %s337 = scalar_lea.hbm %s3, %s336
          %s338 = smul.u32 4, %s330
          %s339 = sshll.u32 %s323, 4
          %s340 = int_to_ptr.vmem [resolvable:$true] %s339
          %s341 = sshll.u32 %s338, 4
          %345 = dma.vmem_to_hbm [thread:$0]  (%p335), %s340, %s341, %s337, %s320, 64, 64, 4
        $region40: #{tpu_custom_call.1} parent=27 // pred_fallthru
          _
      $region28: #{tpu_custom_call.1} parent=5 // pred_fallthru
        _
      %p346 = scmp.le.s32.totalorder 2, %s17
      // Predicated region
      $region41: #{tpu_custom_call.1} parent=5 // pred_check
        %p347 = pneg %p346
      $region42: #{tpu_custom_call.1} parent=5 // pred_check_branch
        %349 = sbr.rel (%p347) target = $region44
      $region43: #{tpu_custom_call.1} parent=5 // pred_region
        %s350 = ssub.s32 %s17, 2
        // Predicated region
        $region45: #{tpu_custom_call.1} parent=43 // pred_check
          %p351 = pneg %p93
        $region46: #{tpu_custom_call.1} parent=43 // pred_check_branch
          %353 = sbr.rel (%p351) target = $region48
        $region47: #{tpu_custom_call.1} parent=43 // pred_region
          %s354 = sand.u32 %s78, 1
          %s355 = scalar_lea.sflag [#allocation6], %s354
          %s356 = sand.u32 %s78, 1
          %s357 = smul.addr %s356, 8
          %s358 = scalar_lea.vmem [#allocation9], %s357
          %359 = dma.done %s355, 128
        $region48: #{tpu_custom_call.1} parent=43 // pred_fallthru
          _
      $region44: #{tpu_custom_call.1} parent=5 // pred_fallthru
        _
    $region6: #{tpu_custom_call.1} parent=1 // loop_footer
      %s21 = sadd.s32 1, %s17
    $region7: #{tpu_custom_call.1} parent=1 // loop_footer_branch
      %16 = sbr.rel target = $region3
    $region8: #{tpu_custom_call.1} parent=1 // loop_exit
      _
    %360 = vsyncpa [#allocation5], 1
    %s361 = scalar_lea.sflag [#allocation5], 1
    %362 = vsyncpa %s361, 1
    %363 = vsyncpa [#allocation8], 1
    %364 = vsyncpa [#allocation6], 1
    %s365 = scalar_lea.sflag [#allocation6], 1
    %366 = vsyncpa %s365, 1

</llo_original>
